<compile_context>
chip_gen: v7x
topology: tpu7x:2x2x1
jax: 0.10.0
libtpu: 0.0.40
codegen_flags: <defaults>
</compile_context>

<pallas_src>
import math
import functools
import numpy as np
import jax
import jax.numpy as jnp
from jax import lax
from jax.experimental import pallas as pl
from jax.experimental.pallas import tpu as pltpu

# ---------------- config (small, consistent with the module) ----------------
HIDDEN = 128
NUM_HEADS = 2
HEAD_DIM = HIDDEN // NUM_HEADS          # 64
NUM_KV_HEADS = 1                        # GQA
NUM_KV_GROUPS = NUM_HEADS // NUM_KV_HEADS
MROPE_SECTION = (8, 12, 12)             # sums to HEAD_DIM // 2 = 32
ROPE_THETA = 10000.0
ATTENTION_SCALING = 1.0                 # default rope
BATCH = 2
SEQ = 8

Q_N = NUM_HEADS * HEAD_DIM              # 128
KV_N = NUM_KV_HEADS * HEAD_DIM          # 64
QKV_N = Q_N + 2 * KV_N                  # 256

assert NUM_KV_HEADS == 1, "kernel stacks all Q heads onto the single GQA KV head"


# ------------- Pallas kernel: fused QKV proj + mRoPE + causal attn + o_proj -------------
def fused_attn_kernel(x_ref, wqkv_ref, bqkv_ref, cossin_ref, wo_ref, o_ref):
    # one batch row per grid step:
    #   x_ref      : [1, S, H]
    #   wqkv_ref   : [H, QKV_N]      (wq | wk | wv fused along lanes -> full 256-wide tile)
    #   bqkv_ref   : [1, QKV_N]
    #   cossin_ref : [1, S, 2*D]     (cos | sign-folded sin, 128-lane dense)
    #   wo_ref     : [nH*D, H]
    #   o_ref      : [1, S, H]       (lane-dense 128-wide output tile)
    S = x_ref.shape[1]
    D = HEAD_DIM
    half = D // 2

    x = x_ref[0].astype(jnp.float32)                                  # [S, H]
    qkv = jnp.dot(x, wqkv_ref[...].astype(jnp.float32),
                  preferred_element_type=jnp.float32)                 # [S, QKV_N]
    qkv = qkv + bqkv_ref[...].astype(jnp.float32)

    cs = cossin_ref[0].astype(jnp.float32)                            # [S, 2D]
    cos = cs[:, :D]
    sin_s = cs[:, D:]                                                 # sin with first half negated

    # Stack q0 | q1 | k along sublanes and apply mRoPE to all three heads in ONE pass.
    # rotate-half is a pure lane swap here because the sign lives in sin_s.
    qk = jnp.concatenate([qkv[:, 0:D], qkv[:, D:2 * D], qkv[:, Q_N:Q_N + D]], axis=0)  # [3S, D]
    cos3 = jnp.concatenate([cos, cos, cos], axis=0)                   # [3S, D]
    sin3 = jnp.concatenate([sin_s, sin_s, sin_s], axis=0)             # [3S, D]
    rot = jnp.concatenate([qk[:, half:], qk[:, :half]], axis=-1)      # lane swap only
    qk = qk * cos3 + rot * sin3

    q = qk[:NUM_HEADS * S]                                            # [2S, D] both Q heads stacked
    k = qk[NUM_HEADS * S:]                                            # [S, D]  single GQA KV head
    v = qkv[:, Q_N + KV_N:]                                           # [S, D]

    scale = 1.0 / math.sqrt(D)
    # contract last dims of Q and K directly (no explicit .T / relayout)
    s = lax.dot_general(q, k, (((1,), (1,)), ((), ())),
                        preferred_element_type=jnp.float32) * scale   # [2S, S]

    # causal mask (is_causal=True, attention_mask=None); diagonal always unmasked,
    # so the row max is finite and exp(-inf) -> 0 is safe.
    qi = lax.rem(lax.broadcasted_iota(jnp.int32, (NUM_HEADS * S, S), 0), S)
    ki = lax.broadcasted_iota(jnp.int32, (NUM_HEADS * S, S), 1)
    s = jnp.where(ki <= qi, s, -jnp.inf)

    m = jnp.max(s, axis=-1, keepdims=True)
    p = jnp.exp(s - m)
    l = jnp.sum(p, axis=-1, keepdims=True)
    o_stack = jnp.dot(p, v, preferred_element_type=jnp.float32)       # [2S, D]
    o_stack = o_stack * pl.reciprocal(l, approx=True)

    attn = jnp.concatenate([o_stack[:S], o_stack[S:]], axis=-1)       # [S, nH*D] = [S, 128]
    out = jnp.dot(attn, wo_ref[...].astype(jnp.float32),
                  preferred_element_type=jnp.float32)                 # fused o_proj (bias=False)
    o_ref[0] = out.astype(o_ref.dtype)


def fused_attention(hidden_states, w_qkv, b_qkv, cossin, wo):
    """hidden_states: [B,S,H]; w_qkv: [H,QKV_N]; b_qkv: [1,QKV_N];
    cossin: [B,S,2*D]; wo: [nH*D,H] -> [B,S,H]."""
    B, S, H = hidden_states.shape
    return pl.pallas_call(
        fused_attn_kernel,
        out_shape=jax.ShapeDtypeStruct((B, S, H), hidden_states.dtype),
        grid=(B,),
        in_specs=[
            pl.BlockSpec((1, S, H), lambda b: (b, 0, 0)),
            pl.BlockSpec((H, QKV_N), lambda b: (0, 0)),
            pl.BlockSpec((1, QKV_N), lambda b: (0, 0)),
            pl.BlockSpec((1, S, 2 * HEAD_DIM), lambda b: (b, 0, 0)),
            pl.BlockSpec((Q_N, H), lambda b: (0, 0)),
        ],
        out_specs=pl.BlockSpec((1, S, H), lambda b: (b, 0, 0)),
        compiler_params=pltpu.CompilerParams(
            dimension_semantics=("parallel",)),
    )(hidden_states, w_qkv, b_qkv, cossin, wo)


# ---------------- JAX glue: Qwen2_5_VLRotaryEmbedding + mrope section merge ----------------
def mrope_cos_sin(position_ids, head_dim, mrope_section, theta, dtype):
    """position_ids: [3, B, S] -> (cos, sin) each [B, S, head_dim]."""
    half = head_dim // 2
    inv_freq = 1.0 / (theta ** (jnp.arange(0, head_dim, 2, dtype=jnp.float32) / head_dim))  # [half]
    inv_freq_exp = jnp.broadcast_to(inv_freq[None, None, :, None],
                                    (3, position_ids.shape[1], half, 1))
    pos = position_ids[:, :, None, :].astype(jnp.float32)          # [3, B, 1, S]
    freqs = jnp.swapaxes(inv_freq_exp @ pos, 2, 3)                  # [3, B, S, half]
    emb = jnp.concatenate([freqs, freqs], axis=-1)                  # [3, B, S, head_dim]
    cos = jnp.cos(emb) * ATTENTION_SCALING
    sin = jnp.sin(emb) * ATTENTION_SCALING

    secs = list(mrope_section) * 2
    splits = np.cumsum(secs)[:-1].tolist()
    cos_chunks = jnp.split(cos, splits, axis=-1)
    sin_chunks = jnp.split(sin, splits, axis=-1)
    cos_m = jnp.concatenate([cos_chunks[i][i % 3] for i in range(len(cos_chunks))], axis=-1)
    sin_m = jnp.concatenate([sin_chunks[i][i % 3] for i in range(len(sin_chunks))], axis=-1)
    return cos_m.astype(dtype), sin_m.astype(dtype)


def make_fused_params(params):
    """Offline fusion of the QKV weights / biases (done once, not per call)."""
    return {
        "w_qkv": jnp.concatenate([params["wq"], params["wk"], params["wv"]], axis=1),   # [H, 256]
        "b_qkv": jnp.concatenate([params["bq"], params["bk"], params["bv"]],
                                 axis=0).reshape(1, QKV_N),                             # [1, 256]
        "wo": params["wo"],                                                              # [128, 128]
    }


@jax.jit
def qwen2_flash_attention2_forward(fused_params, hidden_states, position_ids):
    cos, sin = mrope_cos_sin(position_ids, HEAD_DIM, MROPE_SECTION, ROPE_THETA,
                             hidden_states.dtype)
    half = HEAD_DIM // 2
    # fold the rotate-half sign into sin and pack cos|sin into one 128-lane input
    sin_signed = jnp.concatenate([-sin[..., :half], sin[..., half:]], axis=-1)
    cossin = jnp.concatenate([cos, sin_signed], axis=-1)            # [B, S, 2*D] = [B, S, 128]

    return fused_attention(hidden_states, fused_params["w_qkv"], fused_params["b_qkv"],
                           cossin, fused_params["wo"])              # [B, S, H]


# ---------------- pure-JAX reference (for correctness check) ----------------
def reference(params, hidden_states, position_ids):
    B, S, H = hidden_states.shape
    x2d = hidden_states.reshape(B * S, H)
    q = (x2d @ params["wq"] + params["bq"]).reshape(B, S, NUM_HEADS, HEAD_DIM).transpose(0, 2, 1, 3)
    k = (x2d @ params["wk"] + params["bk"]).reshape(B, S, NUM_KV_HEADS, HEAD_DIM).transpose(0, 2, 1, 3)
    v = (x2d @ params["wv"] + params["bv"]).reshape(B, S, NUM_KV_HEADS, HEAD_DIM).transpose(0, 2, 1, 3)
    cos, sin = mrope_cos_sin(position_ids, HEAD_DIM, MROPE_SECTION, ROPE_THETA, hidden_states.dtype)
    cosb, sinb = cos[:, None], sin[:, None]

    def rot_half(x):
        return jnp.concatenate([-x[..., HEAD_DIM // 2:], x[..., :HEAD_DIM // 2]], axis=-1)

    q = q * cosb + rot_half(q) * sinb
    k = k * cosb + rot_half(k) * sinb
    k = jnp.repeat(k, NUM_KV_GROUPS, axis=1)
    v = jnp.repeat(v, NUM_KV_GROUPS, axis=1)
    scores = jnp.einsum("bhqd,bhkd->bhqk", q, k) / math.sqrt(HEAD_DIM)
    mask = jnp.tril(jnp.ones((S, S), dtype=bool))
    scores = jnp.where(mask, scores, -jnp.inf)
    p = jax.nn.softmax(scores, axis=-1)
    out = jnp.einsum("bhqk,bhkd->bhqd", p, v)
    out = out.transpose(0, 2, 1, 3).reshape(B * S, NUM_HEADS * HEAD_DIM)
    return (out @ params["wo"]).reshape(B, S, H)


if __name__ == "__main__":
    key = jax.random.PRNGKey(0)
    ks = jax.random.split(key, 8)
    scale = 0.02
    params = {
        # stored transposed vs. torch nn.Linear.weight ([in, out] instead of [out, in]); synthetic init
        "wq": jax.random.normal(ks[0], (HIDDEN, NUM_HEADS * HEAD_DIM), jnp.float32) * scale,
        "bq": jax.random.normal(ks[1], (NUM_HEADS * HEAD_DIM,), jnp.float32) * scale,
        "wk": jax.random.normal(ks[2], (HIDDEN, NUM_KV_HEADS * HEAD_DIM), jnp.float32) * scale,
        "bk": jax.random.normal(ks[3], (NUM_KV_HEADS * HEAD_DIM,), jnp.float32) * scale,
        "wv": jax.random.normal(ks[4], (HIDDEN, NUM_KV_HEADS * HEAD_DIM), jnp.float32) * scale,
        "bv": jax.random.normal(ks[5], (NUM_KV_HEADS * HEAD_DIM,), jnp.float32) * scale,
        "wo": jax.random.normal(ks[6], (NUM_HEADS * HEAD_DIM, HIDDEN), jnp.float32) * scale,
        # o_proj has bias=False -> no "bo" needed
    }
    fused_params = make_fused_params(params)   # offline weight fusion (once)

    hidden_states = jax.random.normal(ks[7], (BATCH, SEQ, HIDDEN), jnp.float32)

    # 3D mrope position ids [3, B, S] (temporal / height / width), slightly offset to exercise mrope
    base = jnp.broadcast_to(jnp.arange(SEQ, dtype=jnp.int32)[None, None, :], (3, BATCH, SEQ))
    position_ids = base + jnp.arange(3, dtype=jnp.int32)[:, None, None]

    out = qwen2_flash_attention2_forward(fused_params, hidden_states, position_ids)
    out = jax.block_until_ready(out)

    ref = reference(params, hidden_states, position_ids)
    np.testing.assert_allclose(np.asarray(out), np.asarray(ref), rtol=2e-4, atol=2e-4)
    print("KERNEL_OK")
</pallas_src>

<mosaic_0001>
module attributes {stable_mosaic.version = 11 : i64} {
  func.func @fused_attn_kernel(%arg0: i32, %arg1: memref<1x8x128xf32, #tpu.memory_space<vmem>>, %arg2: memref<128x256xf32, #tpu.memory_space<vmem>>, %arg3: memref<1x256xf32, #tpu.memory_space<vmem>>, %arg4: memref<1x8x128xf32, #tpu.memory_space<vmem>>, %arg5: memref<128x128xf32, #tpu.memory_space<vmem>>, %arg6: memref<1x8x128xf32, #tpu.memory_space<vmem>>) attributes {dimension_semantics = [#tpu.dimension_semantics<parallel>], iteration_bounds = array<i64: 2>, scalar_prefetch = 0 : i64, scratch_operands = 0 : i64, tpu.core_type = #tpu.core_type<tc>, window_params = [{transform_indices = @transform_0, window_bounds = array<i64: 1, 8, 128>}, {pipeline_mode = #tpu.pipeline_mode<synchronous>, transform_indices = @transform_1, window_bounds = array<i64: 128, 256>}, {pipeline_mode = #tpu.pipeline_mode<synchronous>, transform_indices = @transform_2, window_bounds = array<i64: 1, 256>}, {transform_indices = @transform_3, window_bounds = array<i64: 1, 8, 128>}, {pipeline_mode = #tpu.pipeline_mode<synchronous>, transform_indices = @transform_4, window_bounds = array<i64: 128, 128>}, {transform_indices = @transform_5, window_bounds = array<i64: 1, 8, 128>}]} {
    %c0 = arith.constant 0 : index
    %c0_0 = arith.constant 0 : index
    %c0_1 = arith.constant 0 : index
    %0 = vector.load %arg1[%c0, %c0_0, %c0_1] : memref<1x8x128xf32, #tpu.memory_space<vmem>>, vector<1x8x128xf32>
    %1 = vector.shape_cast %0 : vector<1x8x128xf32> to vector<8x128xf32>
    %c0_2 = arith.constant 0 : index
    %c0_3 = arith.constant 0 : index
    %2 = vector.load %arg2[%c0_2, %c0_3] : memref<128x256xf32, #tpu.memory_space<vmem>>, vector<128x256xf32>
    %cst = arith.constant dense<0.000000e+00> : vector<8x256xf32>
    %3 = tpu.matmul %1, %2, %cst {dimension_numbers = #tpu.dot_dimension_numbers<[1], [0], [0], [1], [0, 0, 1, 1], [], []>} : vector<8x128xf32>, vector<128x256xf32>, vector<8x256xf32> -> vector<8x256xf32>
    %c0_4 = arith.constant 0 : index
    %c0_5 = arith.constant 0 : index
    %4 = vector.load %arg3[%c0_4, %c0_5] : memref<1x256xf32, #tpu.memory_space<vmem>>, vector<1x256xf32>
    %5 = vector.broadcast %4 : vector<1x256xf32> to vector<8x256xf32>
    %6 = arith.addf %3, %5 : vector<8x256xf32>
    %c0_6 = arith.constant 0 : index
    %c0_7 = arith.constant 0 : index
    %c0_8 = arith.constant 0 : index
    %7 = vector.load %arg4[%c0_6, %c0_7, %c0_8] : memref<1x8x128xf32, #tpu.memory_space<vmem>>, vector<1x8x128xf32>
    %8 = vector.shape_cast %7 : vector<1x8x128xf32> to vector<8x128xf32>
    %9 = vector.extract_strided_slice %8 {offsets = [0, 0], sizes = [8, 64], strides = [1, 1]} : vector<8x128xf32> to vector<8x64xf32>
    %10 = vector.extract_strided_slice %8 {offsets = [0, 64], sizes = [8, 64], strides = [1, 1]} : vector<8x128xf32> to vector<8x64xf32>
    %11 = vector.extract_strided_slice %6 {offsets = [0, 0], sizes = [8, 64], strides = [1, 1]} : vector<8x256xf32> to vector<8x64xf32>
    %12 = vector.extract_strided_slice %6 {offsets = [0, 64], sizes = [8, 64], strides = [1, 1]} : vector<8x256xf32> to vector<8x64xf32>
    %13 = vector.extract_strided_slice %6 {offsets = [0, 128], sizes = [8, 64], strides = [1, 1]} : vector<8x256xf32> to vector<8x64xf32>
    %14 = tpu.concatenate %11, %12, %13 in 0 : vector<8x64xf32>, vector<8x64xf32>, vector<8x64xf32> -> vector<24x64xf32>
    %15 = tpu.concatenate %9, %9, %9 in 0 : vector<8x64xf32>, vector<8x64xf32>, vector<8x64xf32> -> vector<24x64xf32>
    %16 = tpu.concatenate %10, %10, %10 in 0 : vector<8x64xf32>, vector<8x64xf32>, vector<8x64xf32> -> vector<24x64xf32>
    %17 = vector.extract_strided_slice %14 {offsets = [0, 32], sizes = [24, 32], strides = [1, 1]} : vector<24x64xf32> to vector<24x32xf32>
    %18 = vector.extract_strided_slice %14 {offsets = [0, 0], sizes = [24, 32], strides = [1, 1]} : vector<24x64xf32> to vector<24x32xf32>
    %19 = tpu.concatenate %17, %18 in 1 : vector<24x32xf32>, vector<24x32xf32> -> vector<24x64xf32>
    %20 = arith.mulf %14, %15 : vector<24x64xf32>
    %21 = arith.mulf %19, %16 : vector<24x64xf32>
    %22 = arith.addf %20, %21 : vector<24x64xf32>
    %23 = vector.extract_strided_slice %22 {offsets = [0, 0], sizes = [16, 64], strides = [1, 1]} : vector<24x64xf32> to vector<16x64xf32>
    %24 = vector.extract_strided_slice %22 {offsets = [16, 0], sizes = [8, 64], strides = [1, 1]} : vector<24x64xf32> to vector<8x64xf32>
    %25 = vector.extract_strided_slice %6 {offsets = [0, 192], sizes = [8, 64], strides = [1, 1]} : vector<8x256xf32> to vector<8x64xf32>
    %cst_9 = arith.constant dense<0.000000e+00> : vector<16x8xf32>
    %26 = tpu.matmul %23, %24, %cst_9 {dimension_numbers = #tpu.dot_dimension_numbers<[1], [1], [0], [0], [0, 0, 1, 0], [], []>} : vector<16x64xf32>, vector<8x64xf32>, vector<16x8xf32> -> vector<16x8xf32>
    %cst_10 = arith.constant 1.250000e-01 : f32
    %27 = vector.broadcast %cst_10 : f32 to vector<16x8xf32>
    %28 = arith.mulf %26, %27 : vector<16x8xf32>
    %29 = tpu.iota {dimensions = array<i32: 0>} : vector<16x8xi32>
    %c8_i32 = arith.constant 8 : i32
    %30 = vector.broadcast %c8_i32 : i32 to vector<16x8xi32>
    %31 = arith.remsi %29, %30 : vector<16x8xi32>
    %32 = tpu.iota {dimensions = array<i32: 1>} : vector<16x8xi32>
    %33 = arith.cmpi sle, %32, %31 : vector<16x8xi32>
    %cst_11 = arith.constant 0xFF800000 : f32
    %34 = vector.broadcast %cst_11 : f32 to vector<16x8xf32>
    %35 = arith.select %33, %28, %34 : vector<16x8xi1>, vector<16x8xf32>
    %cst_12 = arith.constant dense<0xFF800000> : vector<16xf32>
    %36 = vector.multi_reduction <maximumf>, %35, %cst_12 [1] : vector<16x8xf32> to vector<16xf32>
    %37 = vector.shape_cast %36 : vector<16xf32> to vector<16x1xf32>
    %38 = vector.broadcast %37 : vector<16x1xf32> to vector<16x8xf32>
    %39 = arith.subf %35, %38 : vector<16x8xf32>
    %40 = math.exp %39 : vector<16x8xf32>
    %cst_13 = arith.constant dense<0.000000e+00> : vector<16xf32>
    %41 = vector.multi_reduction <add>, %40, %cst_13 [1] : vector<16x8xf32> to vector<16xf32>
    %42 = vector.shape_cast %41 : vector<16xf32> to vector<16x1xf32>
    %cst_14 = arith.constant dense<0.000000e+00> : vector<16x64xf32>
    %43 = tpu.matmul %40, %25, %cst_14 {dimension_numbers = #tpu.dot_dimension_numbers<[1], [0], [0], [1], [0, 0, 1, 1], [], []>} : vector<16x8xf32>, vector<8x64xf32>, vector<16x64xf32> -> vector<16x64xf32>
    %44 = tpu.reciprocal %42 {approx = true} : vector<16x1xf32> -> vector<16x1xf32>
    %45 = vector.broadcast %44 : vector<16x1xf32> to vector<16x64xf32>
    %46 = arith.mulf %43, %45 : vector<16x64xf32>
    %47 = vector.extract_strided_slice %46 {offsets = [0, 0], sizes = [8, 64], strides = [1, 1]} : vector<16x64xf32> to vector<8x64xf32>
    %48 = vector.extract_strided_slice %46 {offsets = [8, 0], sizes = [8, 64], strides = [1, 1]} : vector<16x64xf32> to vector<8x64xf32>
    %49 = tpu.concatenate %47, %48 in 1 : vector<8x64xf32>, vector<8x64xf32> -> vector<8x128xf32>
    %c0_15 = arith.constant 0 : index
    %c0_16 = arith.constant 0 : index
    %50 = vector.load %arg5[%c0_15, %c0_16] : memref<128x128xf32, #tpu.memory_space<vmem>>, vector<128x128xf32>
    %cst_17 = arith.constant dense<0.000000e+00> : vector<8x128xf32>
    %51 = tpu.matmul %49, %50, %cst_17 {dimension_numbers = #tpu.dot_dimension_numbers<[1], [0], [0], [1], [0, 0, 1, 1], [], []>} : vector<8x128xf32>, vector<128x128xf32>, vector<8x128xf32> -> vector<8x128xf32>
    %c0_18 = arith.constant 0 : index
    %c0_19 = arith.constant 0 : index
    %c0_20 = arith.constant 0 : index
    %52 = vector.load %arg6[%c0_18, %c0_19, %c0_20] : memref<1x8x128xf32, #tpu.memory_space<vmem>>, vector<1x8x128xf32>
    %53 = vector.shape_cast %52 : vector<1x8x128xf32> to vector<8x128xf32>
    %54 = vector.shape_cast %51 : vector<8x128xf32> to vector<1x8x128xf32>
    tpu.vector_store %arg6[%c0_18, %c0_19, %c0_20], %54 {strides = array<i32>} : memref<1x8x128xf32, #tpu.memory_space<vmem>>, vector<1x8x128xf32>,
    return
  }
  func.func @transform_0(%arg0: i32) -> (i32, i32, i32) {
    %c0_i32 = arith.constant 0 : i32
    %c0_i32_0 = arith.constant 0 : i32
    %c0_i32_1 = arith.constant 0 : i32
    return %arg0, %c0_i32, %c0_i32_0 : i32, i32, i32
  }
  func.func @transform_1(%arg0: i32) -> (i32, i32) {
    %c0_i32 = arith.constant 0 : i32
    %c0_i32_0 = arith.constant 0 : i32
    %c0_i32_1 = arith.constant 0 : i32
    return %c0_i32, %c0_i32_0 : i32, i32
  }
  func.func @transform_2(%arg0: i32) -> (i32, i32) {
    %c0_i32 = arith.constant 0 : i32
    %c0_i32_0 = arith.constant 0 : i32
    %c0_i32_1 = arith.constant 0 : i32
    return %c0_i32, %c0_i32_0 : i32, i32
  }
  func.func @transform_3(%arg0: i32) -> (i32, i32, i32) {
    %c0_i32 = arith.constant 0 : i32
    %c0_i32_0 = arith.constant 0 : i32
    %c0_i32_1 = arith.constant 0 : i32
    return %arg0, %c0_i32, %c0_i32_0 : i32, i32, i32
  }
  func.func @transform_4(%arg0: i32) -> (i32, i32) {
    %c0_i32 = arith.constant 0 : i32
    %c0_i32_0 = arith.constant 0 : i32
    %c0_i32_1 = arith.constant 0 : i32
    return %c0_i32, %c0_i32_0 : i32, i32
  }
  func.func @transform_5(%arg0: i32) -> (i32, i32, i32) {
    %c0_i32 = arith.constant 0 : i32
    %c0_i32_0 = arith.constant 0 : i32
    %c0_i32_1 = arith.constant 0 : i32
    return %arg0, %c0_i32, %c0_i32_0 : i32, i32, i32
  }
}

</mosaic_0001>

<llo_original>
// kernel: qwen2_flash_attention2_forward.1
$region0: #{qwen2_flash_attention2_forward.1}
  #allocation0 [shape = 'u32[]', space=smem, size = 0x4, offset = 0x4, fixed_abs, tag = 'smem constant byte address 0x4 - core index']
  #allocation1 [shape = 'u32[144,128]{1,0:T(1,128)}', space=vmem, size = 0x12000, scoped, tag = 'internal scratch']
  %s0 = inlined_call_operand.vmem [shape: f32[2,8,128], index: 0, kind: input, shape index: {}]
  %s1 = inlined_call_operand.vmem [shape: f32[128,256], index: 1, kind: input, shape index: {}]
  %s2 = inlined_call_operand.vmem [shape: f32[1,256], index: 2, kind: input, shape index: {}]
  %s3 = inlined_call_operand.vmem [shape: f32[2,8,128], index: 3, kind: input, shape index: {}]
  %s4 = inlined_call_operand.vmem [shape: f32[128,128], index: 4, kind: input, shape index: {}]
  %s5 = inlined_call_operand.hbm [shape: f32[2,8,128], index: 5, kind: output, shape index: {}]
  %s6 = sld [smem:[#allocation0]]
  $region53: #{qwen2_flash_attention2_forward.1} parent=0
    _
  %s8 = ssub.s32 1, %s6
  %s9 = scalar_select 0, %s8, %s6
  $region1: #{qwen2_flash_attention2_forward.1} parent=0
    #allocation2 [shape = 'u8[8192]{0}', space=vmem, size = 0x2000, scoped, tag = 'output window, operand 0']
    #allocation3 [shape = 's32[2]{0}', space=sflag, size = 0x8, scoped, tag = 'scoped memory for qwen2_flash_attention2_forward.1']
    %10 = vsyncpa [#allocation3], 0
    %s11 = scalar_lea.sflag [#allocation3], 1
    %12 = vsyncpa %s11, 0
    loop: start=0, step=1, limit=4
    $region2: #{qwen2_flash_attention2_forward.1} parent=1 // loop_pre_header
      _
    $region3: #{qwen2_flash_attention2_forward.1} parent=1 // loop_header
      %s14 = sphi 0, %s18
      %p15 = scmp.ge.s32.totalorder %s14, 4
      %s24 = sphi 0, %s26
      %s27 = sphi 0, %s24
      %s28 = sphi 0, %s27
      %s44 = sphi 0, %s28
      %s48 = sphi 0, %s48
      %s50 = sphi 0, %s48
      %s51 = sphi 0, %s50
      %s65 = sphi 0, %s51
      %s69 = sphi 0, %s69
      %s71 = sphi 0, %s69
      %s72 = sphi 0, %s71
      %s86 = sphi 0, %s72
      %s92 = sphi 0, %s94
      %s95 = sphi 0, %s92
      %s96 = sphi 0, %s95
      %s112 = sphi 0, %s96
      %s116 = sphi 0, %s116
      %s118 = sphi 0, %s116
      %s119 = sphi 0, %s118
      %s133 = sphi 0, %s119
      %s139 = sphi 0, %s141
      %s142 = sphi 0, %s139
      %s143 = sphi 0, %s142
      %s159 = sphi 0, %s143
    $region4: #{qwen2_flash_attention2_forward.1} parent=1 // loop_header_branch
      %17 = sbr.rel (%p15) target = $region8
    $region5: #{qwen2_flash_attention2_forward.1} parent=1 // loop_body
      %s19 = ssub.s32 %s14, 1
      %s20 = ssub.s32 %s14, 2
      %s21 = sadd.s32 %s14, 1
      %s22 = ssub.s32 %s14, %s21
      %p23 = scmp.eq.s32.totalorder %s22, 0
      %s25 = sadd.s32 %s24, 1
      %s26 = scalar_select %p23, %s24, %s25
      %p29 = pneg %p23
      %p30 = scmp.eq.s32.totalorder %s14, 1
      %p31 = por %p29, %p30
      %p32 = scmp.ne.s32.totalorder %s24, %s27
      %p33 = scmp.eq.s32.totalorder %s14, 0
      %p34 = por %p32, %p33
      %p35 = scmp.ne.s32.totalorder %s24, %s27
      %p36 = scmp.eq.s32.totalorder %s19, 1
      %p37 = por %p35, %p36
      %p38 = scmp.ne.s32.totalorder %s27, %s28
      %p39 = scmp.eq.s32.totalorder %s19, 0
      %p40 = por %p38, %p39
      %p41 = scmp.ne.s32.totalorder %s27, %s28
      %p42 = scmp.eq.s32.totalorder %s20, 1
      %p43 = por %p41, %p42
      %p45 = scmp.ne.s32.totalorder %s28, %s44
      %p46 = scmp.eq.s32.totalorder %s20, 0
      %p47 = por %p45, %p46
      %s49 = sadd.s32 %s48, 1
      %p52 = scmp.eq.s32.totalorder %s14, 1
      %p53 = scmp.ne.s32.totalorder %s48, %s50
      %p54 = scmp.eq.s32.totalorder %s14, 0
      %p55 = por %p53, %p54
      %p56 = scmp.ne.s32.totalorder %s48, %s50
      %p57 = scmp.eq.s32.totalorder %s19, 1
      %p58 = por %p56, %p57
      %p59 = scmp.ne.s32.totalorder %s50, %s51
      %p60 = scmp.eq.s32.totalorder %s19, 0
      %p61 = por %p59, %p60
      %p62 = scmp.ne.s32.totalorder %s50, %s51
      %p63 = scmp.eq.s32.totalorder %s20, 1
      %p64 = por %p62, %p63
      %p66 = scmp.ne.s32.totalorder %s51, %s65
      %p67 = scmp.eq.s32.totalorder %s20, 0
      %p68 = por %p66, %p67
      %s70 = sadd.s32 %s69, 1
      %p73 = scmp.eq.s32.totalorder %s14, 1
      %p74 = scmp.ne.s32.totalorder %s69, %s71
      %p75 = scmp.eq.s32.totalorder %s14, 0
      %p76 = por %p74, %p75
      %p77 = scmp.ne.s32.totalorder %s69, %s71
      %p78 = scmp.eq.s32.totalorder %s19, 1
      %p79 = por %p77, %p78
      %p80 = scmp.ne.s32.totalorder %s71, %s72
      %p81 = scmp.eq.s32.totalorder %s19, 0
      %p82 = por %p80, %p81
      %p83 = scmp.ne.s32.totalorder %s71, %s72
      %p84 = scmp.eq.s32.totalorder %s20, 1
      %p85 = por %p83, %p84
      %p87 = scmp.ne.s32.totalorder %s72, %s86
      %p88 = scmp.eq.s32.totalorder %s20, 0
      %p89 = por %p87, %p88
      %s90 = ssub.s32 %s14, %s21
      %p91 = scmp.eq.s32.totalorder %s90, 0
      %s93 = sadd.s32 %s92, 1
      %s94 = scalar_select %p91, %s92, %s93
      %p97 = pneg %p91
      %p98 = scmp.eq.s32.totalorder %s14, 1
      %p99 = por %p97, %p98
      %p100 = scmp.ne.s32.totalorder %s92, %s95
      %p101 = scmp.eq.s32.totalorder %s14, 0
      %p102 = por %p100, %p101
      %p103 = scmp.ne.s32.totalorder %s92, %s95
      %p104 = scmp.eq.s32.totalorder %s19, 1
      %p105 = por %p103, %p104
      %p106 = scmp.ne.s32.totalorder %s95, %s96
      %p107 = scmp.eq.s32.totalorder %s19, 0
      %p108 = por %p106, %p107
      %p109 = scmp.ne.s32.totalorder %s95, %s96
      %p110 = scmp.eq.s32.totalorder %s20, 1
      %p111 = por %p109, %p110
      %p113 = scmp.ne.s32.totalorder %s96, %s112
      %p114 = scmp.eq.s32.totalorder %s20, 0
      %p115 = por %p113, %p114
      %s117 = sadd.s32 %s116, 1
      %p120 = scmp.eq.s32.totalorder %s14, 1
      %p121 = scmp.ne.s32.totalorder %s116, %s118
      %p122 = scmp.eq.s32.totalorder %s14, 0
      %p123 = por %p121, %p122
      %p124 = scmp.ne.s32.totalorder %s116, %s118
      %p125 = scmp.eq.s32.totalorder %s19, 1
      %p126 = por %p124, %p125
      %p127 = scmp.ne.s32.totalorder %s118, %s119
      %p128 = scmp.eq.s32.totalorder %s19, 0
      %p129 = por %p127, %p128
      %p130 = scmp.ne.s32.totalorder %s118, %s119
      %p131 = scmp.eq.s32.totalorder %s20, 1
      %p132 = por %p130, %p131
      %p134 = scmp.ne.s32.totalorder %s119, %s133
      %p135 = scmp.eq.s32.totalorder %s20, 0
      %p136 = por %p134, %p135
      %s137 = ssub.s32 %s14, %s21
      %p138 = scmp.eq.s32.totalorder %s137, 0
      %s140 = sadd.s32 %s139, 1
      %s141 = scalar_select %p138, %s139, %s140
      %p144 = pneg %p138
      %p145 = scmp.eq.s32.totalorder %s14, 1
      %p146 = por %p144, %p145
      %p147 = scmp.ne.s32.totalorder %s139, %s142
      %p148 = scmp.eq.s32.totalorder %s14, 0
      %p149 = por %p147, %p148
      %p150 = scmp.ne.s32.totalorder %s139, %s142
      %p151 = scmp.eq.s32.totalorder %s19, 1
      %p152 = por %p150, %p151
      %p153 = scmp.ne.s32.totalorder %s142, %s143
      %p154 = scmp.eq.s32.totalorder %s19, 0
      %p155 = por %p153, %p154
      %p156 = scmp.ne.s32.totalorder %s142, %s143
      %p157 = scmp.eq.s32.totalorder %s20, 1
      %p158 = por %p156, %p157
      %p160 = scmp.ne.s32.totalorder %s143, %s159
      %p161 = scmp.eq.s32.totalorder %s20, 0
      %p162 = por %p160, %p161
      %p163 = scmp.le.s32.totalorder 1, %s14
      %p164 = scmp.lt.s32.totalorder %s14, 3
      %p165 = pnand %p163, %p164
      %p166 = pneg %p165
      // Predicated region
      $region9: #{qwen2_flash_attention2_forward.1} parent=5 // pred_check
        _
      $region10: #{qwen2_flash_attention2_forward.1} parent=5 // pred_check_branch
        %168 = sbr.rel (%p165) target = $region12
      $region11: #{qwen2_flash_attention2_forward.1} parent=5 // pred_region
        %s169 = ssub.s32 %s14, 1
        // Predicated region
        $region13: #{qwen2_flash_attention2_forward.1} parent=11 // pred_check
          %p170 = pneg %p61
        $region14: #{qwen2_flash_attention2_forward.1} parent=11 // pred_check_branch
          %172 = sbr.rel (%p170) target = $region16
        $region15: #{qwen2_flash_attention2_forward.1} parent=11 // pred_region
          _
        $region16: #{qwen2_flash_attention2_forward.1} parent=11 // pred_fallthru
          _
        // Predicated region
        $region17: #{qwen2_flash_attention2_forward.1} parent=11 // pred_check
          %p173 = pneg %p82
        $region18: #{qwen2_flash_attention2_forward.1} parent=11 // pred_check_branch
          %175 = sbr.rel (%p173) target = $region20
        $region19: #{qwen2_flash_attention2_forward.1} parent=11 // pred_region
          _
        $region20: #{qwen2_flash_attention2_forward.1} parent=11 // pred_fallthru
          _
        // Predicated region
        $region21: #{qwen2_flash_attention2_forward.1} parent=11 // pred_check
          %p176 = pneg %p129
        $region22: #{qwen2_flash_attention2_forward.1} parent=11 // pred_check_branch
          %178 = sbr.rel (%p176) target = $region24
        $region23: #{qwen2_flash_attention2_forward.1} parent=11 // pred_region
          _
        $region24: #{qwen2_flash_attention2_forward.1} parent=11 // pred_fallthru
          _
      $region12: #{qwen2_flash_attention2_forward.1} parent=5 // pred_fallthru
        _
      %p179 = scmp.lt.s32.totalorder %s14, 2
      // Predicated region
      $region25: #{qwen2_flash_attention2_forward.1} parent=5 // pred_check
        %p180 = pneg %p179
      $region26: #{qwen2_flash_attention2_forward.1} parent=5 // pred_check_branch
        %182 = sbr.rel (%p180) target = $region28
      $region27: #{qwen2_flash_attention2_forward.1} parent=5 // pred_region
        // Predicated region
        $region29: #{qwen2_flash_attention2_forward.1} parent=27 // pred_check
          %p183 = pneg %p34
        $region30: #{qwen2_flash_attention2_forward.1} parent=27 // pred_check_branch
          %185 = sbr.rel (%p183) target = $region32
        $region31: #{qwen2_flash_attention2_forward.1} parent=27 // pred_region
          %p186 = scmp.lt.s32.totalorder %s14, 1
          %s187 = scalar_select %p186, %s14, 1
          %s188 = smul.addr %s187, 8
          %s189 = scalar_lea.vmem %s0, %s188
        $region32: #{qwen2_flash_attention2_forward.1} parent=27 // pred_fallthru
          _
        // Predicated region
        $region33: #{qwen2_flash_attention2_forward.1} parent=27 // pred_check
          %p190 = pneg %p102
        $region34: #{qwen2_flash_attention2_forward.1} parent=27 // pred_check_branch
          %192 = sbr.rel (%p190) target = $region36
        $region35: #{qwen2_flash_attention2_forward.1} parent=27 // pred_region
          %p193 = scmp.lt.s32.totalorder %s14, 1
          %s194 = scalar_select %p193, %s14, 1
          %s195 = smul.addr %s194, 8
          %s196 = scalar_lea.vmem %s3, %s195
        $region36: #{qwen2_flash_attention2_forward.1} parent=27 // pred_fallthru
          _
      $region28: #{qwen2_flash_attention2_forward.1} parent=5 // pred_fallthru
        _
      %p197 = scmp.le.s32.totalorder 1, %s14
      %p198 = scmp.lt.s32.totalorder %s14, 3
      %p199 = pnand %p197, %p198
      %p200 = pneg %p199
      // Predicated region
      $region37: #{qwen2_flash_attention2_forward.1} parent=5 // pred_check
        _
      $region38: #{qwen2_flash_attention2_forward.1} parent=5 // pred_check_branch
        %202 = sbr.rel (%p199) target = $region40
      $region39: #{qwen2_flash_attention2_forward.1} parent=5 // pred_region
        %s203 = ssub.s32 %s14, 1
        %p204 = scmp.lt.s32.totalorder %s19, 1
        %s205 = scalar_select %p204, %s19, 1
        %s206 = smul.addr %s205, 8
        %s207 = scalar_lea.vmem %s0, %s206
        %p208 = pneg %p40
        %p209 = pneg %p37
        %p210 = pneg %p61
        %p211 = pneg %p58
        %p212 = pneg %p82
        %p213 = pneg %p79
        %p214 = scmp.lt.s32.totalorder %s19, 1
        %s215 = scalar_select %p214, %s19, 1
        %s216 = smul.addr %s215, 8
        %s217 = scalar_lea.vmem %s3, %s216
        %p218 = pneg %p108
        %p219 = pneg %p105
        %p220 = pneg %p129
        %p221 = pneg %p126
        %p222 = pneg %p155
        %p223 = pneg %p152
        %s224 = sand.u32 %s142, 1
        %s225 = scalar_lea.sflag [#allocation3], %s224
        %s226 = sand.u32 %s142, 1
        %s227 = smul.addr %s226, 8
        %s228 = scalar_lea.vmem [#allocation2], %s227
        %p229 = scmp.lt.s32.totalorder %s19, 1
        %s230 = scalar_select %p229, %s19, 1
        %s231 = smul.addr %s230, 8
        %s232 = scalar_lea.vmem %s0, %s231
        %p233 = scmp.lt.s32.totalorder %s19, 1
        %s234 = scalar_select %p233, %s19, 1
        %s235 = smul.addr %s234, 8
        %s236 = scalar_lea.vmem %s3, %s235
        %v237 = vld [vmem:[%s232] sm:$0xff]
        %v238 = vld [vmem:[%s1] sm:$0xff]
        %v239 = vld [vmem:[%s1 + $0x8] sm:$0xff]
        %v240 = vld [vmem:[%s1 + $0x10] sm:$0xff]
        %v241 = vld [vmem:[%s1 + $0x18] sm:$0xff]
        %v242 = vld [vmem:[%s1 + $0x20] sm:$0xff]
        %v243 = vld [vmem:[%s1 + $0x28] sm:$0xff]
        %v244 = vld [vmem:[%s1 + $0x30] sm:$0xff]
        %v245 = vld [vmem:[%s1 + $0x38] sm:$0xff]
        %v246 = vld [vmem:[%s1 + $0x40] sm:$0xff]
        %v247 = vld [vmem:[%s1 + $0x48] sm:$0xff]
        %v248 = vld [vmem:[%s1 + $0x50] sm:$0xff]
        %v249 = vld [vmem:[%s1 + $0x58] sm:$0xff]
        %v250 = vld [vmem:[%s1 + $0x60] sm:$0xff]
        %v251 = vld [vmem:[%s1 + $0x68] sm:$0xff]
        %v252 = vld [vmem:[%s1 + $0x70] sm:$0xff]
        %v253 = vld [vmem:[%s1 + $0x78] sm:$0xff]
        %v254 = vld [vmem:[%s1 + $0x80] sm:$0xff]
        %v255 = vld [vmem:[%s1 + $0x88] sm:$0xff]
        %v256 = vld [vmem:[%s1 + $0x90] sm:$0xff]
        %v257 = vld [vmem:[%s1 + $0x98] sm:$0xff]
        %v258 = vld [vmem:[%s1 + $0xa0] sm:$0xff]
        %v259 = vld [vmem:[%s1 + $0xa8] sm:$0xff]
        %v260 = vld [vmem:[%s1 + $0xb0] sm:$0xff]
        %v261 = vld [vmem:[%s1 + $0xb8] sm:$0xff]
        %v262 = vld [vmem:[%s1 + $0xc0] sm:$0xff]
        %v263 = vld [vmem:[%s1 + $0xc8] sm:$0xff]
        %v264 = vld [vmem:[%s1 + $0xd0] sm:$0xff]
        %v265 = vld [vmem:[%s1 + $0xd8] sm:$0xff]
        %v266 = vld [vmem:[%s1 + $0xe0] sm:$0xff]
        %v267 = vld [vmem:[%s1 + $0xe8] sm:$0xff]
        %v268 = vld [vmem:[%s1 + $0xf0] sm:$0xff]
        %v269 = vld [vmem:[%s1 + $0xf8] sm:$0xff]
        %v270 = vld [vmem:[%s2] sm:$0x3]
        %v272 = vlaneseq
        %v273 = vshrl.u32 %v272, 7
        %v274 = vsub.s32 0, %v273
        %v275 = vrot.slane %v270, %v274
        %v276 = vlaneseq
        %v277 = vshrl.u32 %v276, 7
        %v278 = vsub.s32 1, %v277
        %v279 = vrot.slane %v270, %v278
        %282 = vmatprep.subr.mxu0 %v239
        %283 = vmatpush1.msra.mxu0 %v238
        %284 = vmatprep.subr.mxu0 %v241
        %285 = vmatpush1.msra.mxu0 %v240
        %286 = vmatprep.subr.mxu0 %v243
        %287 = vmatpush1.msra.mxu0 %v242
        %288 = vmatprep.subr.mxu0 %v245
        %289 = vmatpush1.msra.mxu0 %v244
        %290 = vmatprep.subr.mxu0 %v247
        %291 = vmatpush1.msra.mxu0 %v246
        %292 = vmatprep.subr.mxu0 %v249
        %293 = vmatpush1.msra.mxu0 %v248
        %294 = vmatprep.subr.mxu0 %v251
        %295 = vmatpush1.msra.mxu0 %v250
        %296 = vmatprep.subr.mxu0 %v253
        %297 = vmatpush1.msra.mxu0 %v252
        %298 = vmatprep.subr.mxu0 %v255
        %299 = vmatpush1.msra.mxu0 %v254
        %300 = vmatprep.subr.mxu0 %v257
        %301 = vmatpush1.msra.mxu0 %v256
        %302 = vmatprep.subr.mxu0 %v259
        %303 = vmatpush1.msra.mxu0 %v258
        %304 = vmatprep.subr.mxu0 %v261
        %305 = vmatpush1.msra.mxu0 %v260
        %306 = vmatprep.subr.mxu0 %v263
        %307 = vmatpush1.msra.mxu0 %v262
        %308 = vmatprep.subr.mxu0 %v265
        %309 = vmatpush1.msra.mxu0 %v264
        %310 = vmatprep.subr.mxu0 %v267
        %311 = vmatpush1.msra.mxu0 %v266
        %312 = vmatprep.subr.mxu0 %v269
        %313 = vmatpush1.msra.mxu0 %v268
        %314 = vmatprep.subr.mxu0 0.0
        %315 = vmatpush1.msra.mxu0 0.0
        %316 = vmatprep.subr.mxu0 0.0
        %317 = vmatpush1.msra.mxu0 0.0
        %318 = vmatprep.subr.mxu0 0.0
        %319 = vmatpush1.msra.mxu0 0.0
        %320 = vmatprep.subr.mxu0 0.0
        %321 = vmatpush1.msra.mxu0 0.0
        %322 = vmatprep.subr.mxu0 0.0
        %323 = vmatpush1.msra.mxu0 0.0
        %324 = vmatprep.subr.mxu0 0.0
        %325 = vmatpush1.msra.mxu0 0.0
        %326 = vmatprep.subr.mxu0 0.0
        %327 = vmatpush1.msra.mxu0 0.0
        %328 = vmatprep.subr.mxu0 0.0
        %329 = vmatpush1.msra.mxu0 0.0
        %330 = vmatprep.subr.mxu0 0.0
        %331 = vmatpush1.msra.mxu0 0.0
        %332 = vmatprep.subr.mxu0 0.0
        %333 = vmatpush1.msra.mxu0 0.0
        %334 = vmatprep.subr.mxu0 0.0
        %335 = vmatpush1.msra.mxu0 0.0
        %336 = vmatprep.subr.mxu0 0.0
        %337 = vmatpush1.msra.mxu0 0.0
        %338 = vmatprep.subr.mxu0 0.0
        %339 = vmatpush1.msra.mxu0 0.0
        %340 = vmatprep.subr.mxu0 0.0
        %341 = vmatpush1.msra.mxu0 0.0
        %342 = vmatprep.subr.mxu0 0.0
        %343 = vmatpush1.msra.mxu0 0.0
        %344 = vmatprep.subr.mxu0 0.0
        %345 = vmatpush1.msra.mxu0 0.0
        %346 = vmatprep.mubr.f32.mxu0 0.0
        %347 = vmatmul.mubr.f32.gmra.mrb[0].mxu0 %v237
        %v348 = vpop.f32.mrb[0].mxu0
        %v349 = vadd.f32 %v275, %v348
        %v350 = vpop.f32.mrb[0].mxu0
        %v351 = vadd.f32 %v279, %v350
        %352 = vdwg.mxu0
        %v353 = vld [vmem:[%s236] sm:$0xff]
        %355 = vrot.lane.b32.xlu0 %v349, 64
        %v356 = vpop.permute.xlu0 %355
        %359 = vrot.lane.b32.xlu0 %v349, 96
        %v360 = vpop.permute.xlu0 %359
        %361 = vrot.lane.b32.xlu0 %v356, 96
        %v362 = vpop.permute.xlu0 %361
        %363 = vrot.lane.b32.xlu0 %v351, 96
        %v364 = vpop.permute.xlu0 %363
        %368 = vrot.lane.b32.xlu0 %v349, 32
        %v369 = vpop.permute.xlu0 %368
        %370 = vrot.lane.b32.xlu0 %v356, 32
        %v371 = vpop.permute.xlu0 %370
        %372 = vrot.lane.b32.xlu0 %v351, 32
        %v373 = vpop.permute.xlu0 %372
        %vm377 = vcmask 261120
        %v378 = vsel %vm377, %v360, %v369
        %v379 = vsel %vm377, %v362, %v371
        %v380 = vsel %vm377, %v364, %v373
        %v381 = vmul.f32 %v349, %v353
        %v382 = vmul.f32 %v356, %v353
        %v383 = vmul.f32 %v351, %v353
        %385 = vrot.lane.b32.xlu0 %v353, 64
        %v386 = vpop.permute.xlu0 %385
        %v388 = vmul.f32 %v378, %v386
        %v389 = vmul.f32 %v379, %v386
        %v390 = vmul.f32 %v380, %v386
        %v391 = vadd.f32 %v381, %v388
        %v392 = vadd.f32 %v382, %v389
        %v393 = vadd.f32 %v383, %v390
        %vm394 = vcmask 523264
        %v396 = vsel %vm394, %v391, 0
        %v399 = vsel %vm394, %v392, 0
        %v402 = vsel %vm394, %v393, 0
        %404 = vmatprep.subr.mxu0 0.0
        %405 = vmatpush1.xpose.msra.mxu0 %v402
        %406 = vmatprep.subr.mxu0 0.0
        %407 = vmatpush1.xpose.msra.mxu0 0.0
        %408 = vmatprep.subr.mxu0 0.0
        %409 = vmatpush1.xpose.msra.mxu0 0.0
        %410 = vmatprep.subr.mxu0 0.0
        %411 = vmatpush1.xpose.msra.mxu0 0.0
        %412 = vmatprep.subr.mxu0 0.0
        %413 = vmatpush1.xpose.msra.mxu0 0.0
        %414 = vmatprep.subr.mxu0 0.0
        %415 = vmatpush1.xpose.msra.mxu0 0.0
        %416 = vmatprep.subr.mxu0 0.0
        %417 = vmatpush1.xpose.msra.mxu0 0.0
        %418 = vmatprep.subr.mxu0 0.0
        %419 = vmatpush1.xpose.msra.mxu0 0.0
        %420 = vmatprep.subr.mxu0 0.0
        %421 = vmatpush1.xpose.msra.mxu0 0.0
        %422 = vmatprep.subr.mxu0 0.0
        %423 = vmatpush1.xpose.msra.mxu0 0.0
        %424 = vmatprep.subr.mxu0 0.0
        %425 = vmatpush1.xpose.msra.mxu0 0.0
        %426 = vmatprep.subr.mxu0 0.0
        %427 = vmatpush1.xpose.msra.mxu0 0.0
        %428 = vmatprep.subr.mxu0 0.0
        %429 = vmatpush1.xpose.msra.mxu0 0.0
        %430 = vmatprep.subr.mxu0 0.0
        %431 = vmatpush1.xpose.msra.mxu0 0.0
        %432 = vmatprep.subr.mxu0 0.0
        %433 = vmatpush1.xpose.msra.mxu0 0.0
        %434 = vmatprep.subr.mxu0 0.0
        %435 = vmatpush1.xpose.msra.mxu0 0.0
        %436 = vmatprep.subr.mxu0 0.0
        %437 = vmatpush1.xpose.msra.mxu0 0.0
        %438 = vmatprep.subr.mxu0 0.0
        %439 = vmatpush1.xpose.msra.mxu0 0.0
        %440 = vmatprep.subr.mxu0 0.0
        %441 = vmatpush1.xpose.msra.mxu0 0.0
        %442 = vmatprep.subr.mxu0 0.0
        %443 = vmatpush1.xpose.msra.mxu0 0.0
        %444 = vmatprep.subr.mxu0 0.0
        %445 = vmatpush1.xpose.msra.mxu0 0.0
        %446 = vmatprep.subr.mxu0 0.0
        %447 = vmatpush1.xpose.msra.mxu0 0.0
        %448 = vmatprep.subr.mxu0 0.0
        %449 = vmatpush1.xpose.msra.mxu0 0.0
        %450 = vmatprep.subr.mxu0 0.0
        %451 = vmatpush1.xpose.msra.mxu0 0.0
        %452 = vmatprep.subr.mxu0 0.0
        %453 = vmatpush1.xpose.msra.mxu0 0.0
        %454 = vmatprep.subr.mxu0 0.0
        %455 = vmatpush1.xpose.msra.mxu0 0.0
        %456 = vmatprep.subr.mxu0 0.0
        %457 = vmatpush1.xpose.msra.mxu0 0.0
        %458 = vmatprep.subr.mxu0 0.0
        %459 = vmatpush1.xpose.msra.mxu0 0.0
        %460 = vmatprep.subr.mxu0 0.0
        %461 = vmatpush1.xpose.msra.mxu0 0.0
        %462 = vmatprep.subr.mxu0 0.0
        %463 = vmatpush1.xpose.msra.mxu0 0.0
        %464 = vmatprep.subr.mxu0 0.0
        %465 = vmatpush1.xpose.msra.mxu0 0.0
        %466 = vmatprep.subr.mxu0 0.0
        %467 = vmatpush1.xpose.msra.mxu0 0.0
        %468 = vmatprep.mubr.f32.mxu0 0.0
        %469 = vmatmul.mubr.f32.gmra.mrb[0].mxu0 %v396
        %v470 = vpop.f32.mrb[0].mxu0
        %v471 = vadd.f32 0.0, %v470
        %v472 = vpop.f32.mrb[0].mxu0
        %473 = vmatprep.mubr.f32.mxu0 0.0
        %474 = vmatmul.mubr.f32.gmra.mrb[0].mxu0 %v399
        %v475 = vpop.f32.mrb[0].mxu0
        %v476 = vadd.f32 0.0, %v475
        %v477 = vpop.f32.mrb[0].mxu0
        %478 = vdwg.mxu0
        %v479 = vmul.f32 %v471, 0.125
        %v480 = vmul.f32 %v476, 0.125
        %v481 = vlaneseq
        %v482 = vshrl.u32 %v481, 7
        %v483 = vadd.s32 %v482, 8
        %vm484 = vcmp.lt.s32.totalorder %v482, 0
        %v485 = vsub.s32 0, %v482
        %v486 = vsel %vm484, %v485, %v482
        %v487 = vshrl.u32 %v486, 3
        %v488 = vand.u32 %v486, 7
        %v489 = vsub.s32 0, %v488
        %v490 = vsel %vm484, %v489, %v488
        %vm491 = vcmp.lt.s32.totalorder %v483, 0
        %v492 = vsub.s32 0, %v483
        %v493 = vsel %vm491, %v492, %v483
        %v494 = vshrl.u32 %v493, 3
        %v495 = vand.u32 %v493, 7
        %v496 = vsub.s32 0, %v495
        %v497 = vsel %vm491, %v496, %v495
        %v498 = vlaneseq
        %v499 = vand.u32 %v498, 127
        %vm500 = vcmp.le.s32.totalorder %v499, %v490
        %vm501 = vcmp.le.s32.totalorder %v499, %v497
        %v502 = vsel %vm500, %v479, -inf
        %v503 = vsel %vm501, %v480, -inf
        %vm504 = vcmask 64512
        %v505 = vsel %vm504, %v502, -inf
        %506 = vmax.xlane.f32.xlu0 %v505
        %v507 = vpop.xlane.xlu0 %506
        %v508 = vsel %vm504, %v503, -inf
        %509 = vmax.xlane.f32.xlu0 %v508
        %v510 = vpop.xlane.xlu0 %509
        %v511 = vsub.f32 %v502, %v507
        %v512 = vsub.f32 %v503, %v510
        %v513 = vmul.f32 %v511, 1.442695
        %v514 = vpow.pop %v513
        %v515 = vmul.f32 %v512, 1.442695
        %v516 = vpow.pop %v515
        %v517 = vsel %vm504, %v514, 0.0
        %518 = vadd.xlane.f32.xlu0 %v517
        %v519 = vpop.xlane.xlu0 %518
        %v520 = vsel %vm504, %v516, 0.0
        %521 = vadd.xlane.f32.xlu0 %v520
        %v522 = vpop.xlane.xlu0 %521
        %523 = vrot.lane.b32.xlu0 %v351, 64
        %v524 = vpop.permute.xlu0 %523
        %v527 = vsel %vm504, %v514, 0
        %v530 = vsel %vm504, %v516, 0
        %532 = vmatprep.subr.mxu0 0.0
        %533 = vmatpush1.msra.mxu0 %v524
        %534 = vmatprep.subr.mxu0 0.0
        %535 = vmatpush1.msra.mxu0 0.0
        %536 = vmatprep.subr.mxu0 0.0
        %537 = vmatpush1.msra.mxu0 0.0
        %538 = vmatprep.subr.mxu0 0.0
        %539 = vmatpush1.msra.mxu0 0.0
        %540 = vmatprep.subr.mxu0 0.0
        %541 = vmatpush1.msra.mxu0 0.0
        %542 = vmatprep.subr.mxu0 0.0
        %543 = vmatpush1.msra.mxu0 0.0
        %544 = vmatprep.subr.mxu0 0.0
        %545 = vmatpush1.msra.mxu0 0.0
        %546 = vmatprep.subr.mxu0 0.0
        %547 = vmatpush1.msra.mxu0 0.0
        %548 = vmatprep.subr.mxu0 0.0
        %549 = vmatpush1.msra.mxu0 0.0
        %550 = vmatprep.subr.mxu0 0.0
        %551 = vmatpush1.msra.mxu0 0.0
        %552 = vmatprep.subr.mxu0 0.0
        %553 = vmatpush1.msra.mxu0 0.0
        %554 = vmatprep.subr.mxu0 0.0
        %555 = vmatpush1.msra.mxu0 0.0
        %556 = vmatprep.subr.mxu0 0.0
        %557 = vmatpush1.msra.mxu0 0.0
        %558 = vmatprep.subr.mxu0 0.0
        %559 = vmatpush1.msra.mxu0 0.0
        %560 = vmatprep.subr.mxu0 0.0
        %561 = vmatpush1.msra.mxu0 0.0
        %562 = vmatprep.subr.mxu0 0.0
        %563 = vmatpush1.msra.mxu0 0.0
        %564 = vmatprep.subr.mxu0 0.0
        %565 = vmatpush1.msra.mxu0 0.0
        %566 = vmatprep.subr.mxu0 0.0
        %567 = vmatpush1.msra.mxu0 0.0
        %568 = vmatprep.subr.mxu0 0.0
        %569 = vmatpush1.msra.mxu0 0.0
        %570 = vmatprep.subr.mxu0 0.0
        %571 = vmatpush1.msra.mxu0 0.0
        %572 = vmatprep.subr.mxu0 0.0
        %573 = vmatpush1.msra.mxu0 0.0
        %574 = vmatprep.subr.mxu0 0.0
        %575 = vmatpush1.msra.mxu0 0.0
        %576 = vmatprep.subr.mxu0 0.0
        %577 = vmatpush1.msra.mxu0 0.0
        %578 = vmatprep.subr.mxu0 0.0
        %579 = vmatpush1.msra.mxu0 0.0
        %580 = vmatprep.subr.mxu0 0.0
        %581 = vmatpush1.msra.mxu0 0.0
        %582 = vmatprep.subr.mxu0 0.0
        %583 = vmatpush1.msra.mxu0 0.0
        %584 = vmatprep.subr.mxu0 0.0
        %585 = vmatpush1.msra.mxu0 0.0
        %586 = vmatprep.subr.mxu0 0.0
        %587 = vmatpush1.msra.mxu0 0.0
        %588 = vmatprep.subr.mxu0 0.0
        %589 = vmatpush1.msra.mxu0 0.0
        %590 = vmatprep.subr.mxu0 0.0
        %591 = vmatpush1.msra.mxu0 0.0
        %592 = vmatprep.subr.mxu0 0.0
        %593 = vmatpush1.msra.mxu0 0.0
        %594 = vmatprep.subr.mxu0 0.0
        %595 = vmatpush1.msra.mxu0 0.0
        %596 = vmatprep.mubr.f32.mxu0 0.0
        %597 = vmatmul.mubr.f32.gmra.mrb[0].mxu0 %v527
        %v598 = vpop.f32.mrb[0].mxu0
        %v599 = vadd.f32 0.0, %v598
        %v600 = vpop.f32.mrb[0].mxu0
        %601 = vmatprep.mubr.f32.mxu0 0.0
        %602 = vmatmul.mubr.f32.gmra.mrb[0].mxu0 %v530
        %v603 = vpop.f32.mrb[0].mxu0
        %v604 = vadd.f32 0.0, %v603
        %v605 = vpop.f32.mrb[0].mxu0
        %606 = vdwg.mxu0
        %v607 = vrcp.pop %v519
        %v608 = vrcp.pop %v522
        %v609 = vmul.f32 %v599, %v607
        %v610 = vmul.f32 %v604, %v608
        %612 = vrot.lane.b32.xlu0 %v610, 64
        %v613 = vpop.permute.xlu0 %612
        %v615 = vsel %vm394, %v609, %v613
        %v616 = vld [vmem:[%s4] sm:$0xff]
        %v617 = vld [vmem:[%s4 + $0x8] sm:$0xff]
        %v618 = vld [vmem:[%s4 + $0x10] sm:$0xff]
        %v619 = vld [vmem:[%s4 + $0x18] sm:$0xff]
        %v620 = vld [vmem:[%s4 + $0x20] sm:$0xff]
        %v621 = vld [vmem:[%s4 + $0x28] sm:$0xff]
        %v622 = vld [vmem:[%s4 + $0x30] sm:$0xff]
        %v623 = vld [vmem:[%s4 + $0x38] sm:$0xff]
        %v624 = vld [vmem:[%s4 + $0x40] sm:$0xff]
        %v625 = vld [vmem:[%s4 + $0x48] sm:$0xff]
        %v626 = vld [vmem:[%s4 + $0x50] sm:$0xff]
        %v627 = vld [vmem:[%s4 + $0x58] sm:$0xff]
        %v628 = vld [vmem:[%s4 + $0x60] sm:$0xff]
        %v629 = vld [vmem:[%s4 + $0x68] sm:$0xff]
        %v630 = vld [vmem:[%s4 + $0x70] sm:$0xff]
        %v631 = vld [vmem:[%s4 + $0x78] sm:$0xff]
        %632 = vmatprep.subr.mxu0 0.0
        %633 = vmatpush1.msra.mxu0 %v616
        %634 = vmatprep.subr.mxu0 0.0
        %635 = vmatpush1.msra.mxu0 %v617
        %636 = vmatprep.subr.mxu0 0.0
        %637 = vmatpush1.msra.mxu0 %v618
        %638 = vmatprep.subr.mxu0 0.0
        %639 = vmatpush1.msra.mxu0 %v619
        %640 = vmatprep.subr.mxu0 0.0
        %641 = vmatpush1.msra.mxu0 %v620
        %642 = vmatprep.subr.mxu0 0.0
        %643 = vmatpush1.msra.mxu0 %v621
        %644 = vmatprep.subr.mxu0 0.0
        %645 = vmatpush1.msra.mxu0 %v622
        %646 = vmatprep.subr.mxu0 0.0
        %647 = vmatpush1.msra.mxu0 %v623
        %648 = vmatprep.subr.mxu0 0.0
        %649 = vmatpush1.msra.mxu0 %v624
        %650 = vmatprep.subr.mxu0 0.0
        %651 = vmatpush1.msra.mxu0 %v625
        %652 = vmatprep.subr.mxu0 0.0
        %653 = vmatpush1.msra.mxu0 %v626
        %654 = vmatprep.subr.mxu0 0.0
        %655 = vmatpush1.msra.mxu0 %v627
        %656 = vmatprep.subr.mxu0 0.0
        %657 = vmatpush1.msra.mxu0 %v628
        %658 = vmatprep.subr.mxu0 0.0
        %659 = vmatpush1.msra.mxu0 %v629
        %660 = vmatprep.subr.mxu0 0.0
        %661 = vmatpush1.msra.mxu0 %v630
        %662 = vmatprep.subr.mxu0 0.0
        %663 = vmatpush1.msra.mxu0 %v631
        %664 = vmatprep.subr.mxu0 0.0
        %665 = vmatpush1.msra.mxu0 0.0
        %666 = vmatprep.subr.mxu0 0.0
        %667 = vmatpush1.msra.mxu0 0.0
        %668 = vmatprep.subr.mxu0 0.0
        %669 = vmatpush1.msra.mxu0 0.0
        %670 = vmatprep.subr.mxu0 0.0
        %671 = vmatpush1.msra.mxu0 0.0
        %672 = vmatprep.subr.mxu0 0.0
        %673 = vmatpush1.msra.mxu0 0.0
        %674 = vmatprep.subr.mxu0 0.0
        %675 = vmatpush1.msra.mxu0 0.0
        %676 = vmatprep.subr.mxu0 0.0
        %677 = vmatpush1.msra.mxu0 0.0
        %678 = vmatprep.subr.mxu0 0.0
        %679 = vmatpush1.msra.mxu0 0.0
        %680 = vmatprep.subr.mxu0 0.0
        %681 = vmatpush1.msra.mxu0 0.0
        %682 = vmatprep.subr.mxu0 0.0
        %683 = vmatpush1.msra.mxu0 0.0
        %684 = vmatprep.subr.mxu0 0.0
        %685 = vmatpush1.msra.mxu0 0.0
        %686 = vmatprep.subr.mxu0 0.0
        %687 = vmatpush1.msra.mxu0 0.0
        %688 = vmatprep.subr.mxu0 0.0
        %689 = vmatpush1.msra.mxu0 0.0
        %690 = vmatprep.subr.mxu0 0.0
        %691 = vmatpush1.msra.mxu0 0.0
        %692 = vmatprep.subr.mxu0 0.0
        %693 = vmatpush1.msra.mxu0 0.0
        %694 = vmatprep.subr.mxu0 0.0
        %695 = vmatpush1.msra.mxu0 0.0
        %696 = vmatprep.mubr.f32.mxu0 0.0
        %697 = vmatmul.mubr.f32.gmra.mrb[0].mxu0 %v615
        %v698 = vpop.f32.mrb[0].mxu0
        %v699 = vadd.f32 0.0, %v698
        %v700 = vpop.f32.mrb[0].mxu0
        %701 = vdwg.mxu0
        %702 = vst [vmem:[%s228] sm:$0xff] %v699
        %s703 = sand.u32 %s142, 1
        %s704 = scalar_lea.sflag [#allocation3], %s703
        %s705 = sand.u32 %s142, 1
        %s706 = smul.addr %s705, 8
        %s707 = scalar_lea.vmem [#allocation2], %s706
        // Predicated region
        $region41: #{qwen2_flash_attention2_forward.1} parent=39 // pred_check
          %p708 = pneg %p152
        $region42: #{qwen2_flash_attention2_forward.1} parent=39 // pred_check_branch
          %710 = sbr.rel (%p708) target = $region44
        $region43: #{qwen2_flash_attention2_forward.1} parent=39 // pred_region
          %s712 = ssub.s32 128, 128
          %713 = vsyncadd %s704, %s712
          %s714 = smul.addr %s19, 128
          %s715 = scalar_lea.hbm %s5, %s714
          %s717 = sshll.u32 %s707, 4
          %s718 = int_to_ptr.vmem [resolvable:$true] %s717
          %720 = dma.vmem_to_hbm [thread:$0]  %s718, 128, %s715, %s704
        $region44: #{qwen2_flash_attention2_forward.1} parent=39 // pred_fallthru
          _
      $region40: #{qwen2_flash_attention2_forward.1} parent=5 // pred_fallthru
        _
      %p721 = scmp.le.s32.totalorder 2, %s14
      // Predicated region
      $region45: #{qwen2_flash_attention2_forward.1} parent=5 // pred_check
        %p722 = pneg %p721
      $region46: #{qwen2_flash_attention2_forward.1} parent=5 // pred_check_branch
        %724 = sbr.rel (%p722) target = $region48
      $region47: #{qwen2_flash_attention2_forward.1} parent=5 // pred_region
        %s725 = ssub.s32 %s14, 2
        // Predicated region
        $region49: #{qwen2_flash_attention2_forward.1} parent=47 // pred_check
          %p726 = pneg %p158
        $region50: #{qwen2_flash_attention2_forward.1} parent=47 // pred_check_branch
          %728 = sbr.rel (%p726) target = $region52
        $region51: #{qwen2_flash_attention2_forward.1} parent=47 // pred_region
          %s729 = sand.u32 %s143, 1
          %s730 = scalar_lea.sflag [#allocation3], %s729
          %s731 = sand.u32 %s143, 1
          %s732 = smul.addr %s731, 8
          %s733 = scalar_lea.vmem [#allocation2], %s732
          %734 = dma.done %s730, 128
        $region52: #{qwen2_flash_attention2_forward.1} parent=47 // pred_fallthru
          _
      $region48: #{qwen2_flash_attention2_forward.1} parent=5 // pred_fallthru
        _
    $region6: #{qwen2_flash_attention2_forward.1} parent=1 // loop_footer
      %s18 = sadd.s32 1, %s14
    $region7: #{qwen2_flash_attention2_forward.1} parent=1 // loop_footer_branch
      %13 = sbr.rel target = $region3
    $region8: #{qwen2_flash_attention2_forward.1} parent=1 // loop_exit
      _
    %735 = vsyncpa [#allocation3], 1
    %s736 = scalar_lea.sflag [#allocation3], 1
    %737 = vsyncpa %s736, 1

</llo_original>
